<compile_context>
chip_gen: v6e
topology: v6e:2x2x1
jax: 0.10.0
libtpu: 0.0.40
codegen_flags: <defaults>
</compile_context>

<pallas_src>
import functools

import jax
import jax.numpy as jnp
from jax.experimental import pallas as pl
from jax.experimental.pallas import tpu as pltpu

H1 = 256
H2 = 128
NEG_SLOPE = 0.01          # PyTorch LeakyReLU default
LANE = 128
SUBLANE = 8

DEFAULT_COMPUTE_DTYPE = jnp.bfloat16


def _round_up(x, m):
    return ((x + m - 1) // m) * m


def _leaky_relu(x):
    return jnp.where(x > 0, x, NEG_SLOPE * x)


# --------------------------------------------------------------------------
# Kernel
# --------------------------------------------------------------------------
def fcout_kernel(x_ref, w1_ref, b1_ref, w2_ref, b2_ref, w3_ref, b3_ref, o_ref):
    # Cast x to the weight/compute dtype in VMEM (avoids a separate wrapper
    # HBM read+write pass over x on the bf16 path).
    x = x_ref[...].astype(w1_ref.dtype)
    # Layer 1: (tb, Din) @ (Din, 256), f32 accumulation, f32 bias + LeakyReLU.
    h = jnp.dot(x, w1_ref[...], preferred_element_type=jnp.float32)
    h = _leaky_relu(h + b1_ref[...])
    # Layer 2: (tb, 256) @ (256, 128).  Downcast only for the matmul; all
    # vector math stays in f32 (v5e has no bf16 VPU/EUP).
    h = jnp.dot(h.astype(w2_ref.dtype), w2_ref[...],
                preferred_element_type=jnp.float32)
    h = _leaky_relu(h + b2_ref[...])
    # Layer 3: (tb, 128) @ (128, Dout).
    y = jnp.dot(h.astype(w3_ref.dtype), w3_ref[...],
                preferred_element_type=jnp.float32)
    y = y + b3_ref[...]
    o_ref[...] = y.astype(o_ref.dtype)


# --------------------------------------------------------------------------
# Hardware / capability probes (cached)
# --------------------------------------------------------------------------
_HW_CACHE = {}


def _hw_info():
    """(physical VMEM bytes per core, TensorCores per chip), with fallbacks."""
    if "vmem" not in _HW_CACHE:
        vmem = 64 * 1024 * 1024          # conservative default (v7x-sized)
        got_info = False
        try:
            vmem = int(pltpu.get_tpu_info().vmem_capacity_bytes)
            got_info = True
        except Exception:
            pass
        kind = ""
        try:
            kind = jax.devices()[0].device_kind.lower()
        except Exception:
            pass
        # v7x: 2 TensorCores/chip and 64 MiB VMEM/TC; v5e/v6e: 1 TC, 128 MiB.
        num_tc = 2 if ("v7" in kind or (got_info and vmem <= 64 * 1024 * 1024)) else 1
        _HW_CACHE["vmem"] = vmem
        _HW_CACHE["num_tc"] = num_tc
    return _HW_CACHE["vmem"], _HW_CACHE["num_tc"]


def _buffered_blockspec_supported():
    try:
        pl.BlockSpec((SUBLANE, LANE), lambda i: (0, 0),
                     pipeline_mode=pl.Buffered(1))
        return True
    except Exception:
        return False


_BUFFERED_SUPPORTED = _buffered_blockspec_supported()
# Resolved on first call: does this build also *lower* Buffered(1) specs?
_BUFFERED_STATE = {"ok": None}


# --------------------------------------------------------------------------
# Tile-size / VMEM budgeting (generation-aware)
# --------------------------------------------------------------------------
def _choose_block_b(B, d_in, d_out, cd_size, x_size, o_size,
                    vmem_bytes, num_tc, row_align):
    # Usable tile budget: ~48 MiB on v7x (64 MiB physical), ~96 MiB on
    # v5e/v6e (128 MiB physical).
    budget = int(0.75 * vmem_bytes)
    # Weights counted double-buffered (covers the non-Buffered(1) fallback).
    weight_bytes = 2 * ((d_in * H1 + H1 * H2 + H2 * d_out) * cd_size
                        + (H1 + H2 + d_out) * 4)
    # Per-row VMEM: double-buffered x/out tiles, f32 intermediates (h1,h2,y)
    # and the compute-dtype copies fed to the MXU (x, h1, h2).
    per_row = (2 * (d_in * x_size + d_out * o_size)
               + (H1 + H2 + d_out) * 4
               + (d_in + H1 + H2) * cd_size)
    internal = 4 * 1024 * 1024           # Mosaic internal scratch allowance
    max_rows = max(row_align,
                   (budget - weight_bytes - internal) // max(per_row, 1))

    blk = min(2048, max_rows)                   # HBM/overhead-bound: go big
    blk = min(blk, _round_up(B, row_align))     # don't overshoot tiny batches
    blk = max(row_align, (blk // row_align) * row_align)

    if num_tc >= 2:
        # v7x only: keep both TensorCores busy with a balanced (even) number
        # of grid steps under dimension_semantics=("parallel",).
        steps = -(-B // blk)
        if steps == 1 and B > row_align:
            steps = 2
        elif steps > 1 and steps % 2 == 1:
            steps += 1
        blk = min(blk, _round_up(-(-B // steps), row_align))
        blk = max(row_align, (blk // row_align) * row_align)
    return int(blk)


def _vmem_limit_bytes(block_b, d_in, d_out, cd_size, x_size, o_size, vmem_bytes):
    weight_bytes = 2 * ((d_in * H1 + H1 * H2 + H2 * d_out) * cd_size
                        + (H1 + H2 + d_out) * 4)
    io_bytes = 2 * block_b * (d_in * x_size + d_out * o_size)
    act_bytes = block_b * ((H1 + H2 + d_out) * 4 + (d_in + H1 + H2) * cd_size)
    est = weight_bytes + io_bytes + act_bytes + 4 * 1024 * 1024
    # Leave headroom under physical VMEM (v7x: ~54 MiB cap; v5e/v6e: ~108 MiB).
    cap = int(0.85 * vmem_bytes)
    return int(min(cap, max(32 * 1024 * 1024, int(1.25 * est))))


# --------------------------------------------------------------------------
# pallas_call wrapper
# --------------------------------------------------------------------------
@functools.partial(jax.jit,
                   static_argnames=("block_b", "use_buffered", "vmem_limit"))
def _fcout_call(x, w1, b1, w2, b2, w3, b3, *, block_b, use_buffered, vmem_limit):
    B, D_in = x.shape
    D_out = w3.shape[1]
    grid = (pl.cdiv(B, block_b),)

    def const_spec(shape):
        idx = lambda i: (0,) * len(shape)
        if use_buffered:
            # Grid-invariant operands: single-buffer to avoid 2x weight VMEM.
            return pl.BlockSpec(shape, idx, pipeline_mode=pl.Buffered(1))
        return pl.BlockSpec(shape, idx)

    flops = 2 * B * (D_in * H1 + H1 * H2 + H2 * D_out)
    bytes_accessed = (B * D_in * x.dtype.itemsize
                      + B * D_out * x.dtype.itemsize
                      + (D_in * H1 + H1 * H2 + H2 * D_out) * w1.dtype.itemsize
                      + (H1 + H2 + D_out) * 4)

    return pl.pallas_call(
        fcout_kernel,
        out_shape=jax.ShapeDtypeStruct((B, D_out), x.dtype),
        grid_spec=pltpu.PrefetchScalarGridSpec(
            num_scalar_prefetch=0,
            grid=grid,
            in_specs=[
                pl.BlockSpec((block_b, D_in), lambda i: (i, 0)),   # x tile
                const_spec((D_in, H1)),                            # W1
                const_spec((1, H1)),                               # b1 (f32)
                const_spec((H1, H2)),                              # W2
                const_spec((1, H2)),                               # b2 (f32)
                const_spec((H2, D_out)),                           # W3
                const_spec((1, D_out)),                            # b3 (f32)
            ],
            out_specs=pl.BlockSpec((block_b, D_out), lambda i: (i, 0)),
        ),
        compiler_params=pltpu.CompilerParams(
            dimension_semantics=("parallel",),
            vmem_limit_bytes=vmem_limit,
        ),
        cost_estimate=pl.CostEstimate(
            flops=flops, transcendentals=0, bytes_accessed=bytes_accessed),
    )(x, w1, b1, w2, b2, w3, b3)


# --------------------------------------------------------------------------
# Public API
# --------------------------------------------------------------------------
def prepare_params(w1, b1, w2, b2, w3, b3, compute_dtype=DEFAULT_COMPUTE_DTYPE):
    """One-time parameter prep (hoisted out of the per-call path).

    Weights are cast to the MXU compute dtype (bf16 by default -- safe on
    v5e/v6e/v7x because the kernel accumulates in f32 and runs bias/LeakyReLU
    in f32).  Biases stay f32, reshaped to (1, H) for lane-major broadcasting.
    """
    cd = jnp.dtype(compute_dtype)
    return (jnp.asarray(w1).astype(cd),
            jnp.asarray(b1, jnp.float32).reshape(1, -1),
            jnp.asarray(w2).astype(cd),
            jnp.asarray(b2, jnp.float32).reshape(1, -1),
            jnp.asarray(w3).astype(cd),
            jnp.asarray(b3, jnp.float32).reshape(1, -1))


def fcout_forward(x, params, *, block_b=None):
    """FCOut forward: x (B, input_size) -> (B, output_size), Dropout p=0.0.

    `params` must come from `prepare_params` (weights pre-cast, biases f32).
    """
    w1, b1, w2, b2, w3, b3 = params
    if b1.ndim != 2 or b2.ndim != 2 or b3.ndim != 2:
        raise ValueError("params must come from prepare_params() (biases (1,H)).")

    B, D_in = x.shape
    D_out = w3.shape[1]
    cd_size = jnp.dtype(w1.dtype).itemsize
    x_size = jnp.dtype(x.dtype).itemsize
    o_size = x_size                                # output stored in x.dtype
    vmem_bytes, num_tc = _hw_info()
    row_align = max(SUBLANE, 32 // x_size)         # 8 for f32 x, 16 for bf16 x

    if block_b is None:
        block_b = _choose_block_b(B, D_in, D_out, cd_size, x_size, o_size,
                                  vmem_bytes, num_tc, row_align)
    block_b = int(block_b)
    vmem_limit = _vmem_limit_bytes(block_b, D_in, D_out, cd_size, x_size,
                                   o_size, vmem_bytes)

    args = (x, w1, b1, w2, b2, w3, b3)

    if _BUFFERED_SUPPORTED and _BUFFERED_STATE["ok"] is None:
        # One-time probe: some builds accept pipeline_mode at construction but
        # reject Buffered(1) at lowering.  On probe failure we fall back to
        # default double-buffered weights; genuine errors (e.g. VMEM OOM) will
        # re-raise from the fallback call below rather than being masked.
        try:
            out = _fcout_call(*args, block_b=block_b, use_buffered=True,
                              vmem_limit=vmem_limit)
            _BUFFERED_STATE["ok"] = True
            return out
        except Exception:
            _BUFFERED_STATE["ok"] = False

    use_buf = bool(_BUFFERED_SUPPORTED and _BUFFERED_STATE["ok"])
    return _fcout_call(*args, block_b=block_b, use_buffered=use_buf,
                       vmem_limit=vmem_limit)


# --------------------------------------------------------------------------
# Init + reference (for the self-test)
# --------------------------------------------------------------------------
def init_params(key, input_size, output_size, dtype=jnp.float32):
    """Deterministic synthetic init (PyTorch-style uniform bounds)."""
    ks = jax.random.split(key, 6)

    def lin(kw, kb, fan_in, fan_out):
        bound = 1.0 / jnp.sqrt(fan_in)
        w = jax.random.uniform(kw, (fan_in, fan_out), dtype, -bound, bound)
        b = jax.random.uniform(kb, (fan_out,), dtype, -bound, bound)
        return w, b

    w1, b1 = lin(ks[0], ks[1], input_size, H1)
    w2, b2 = lin(ks[2], ks[3], H1, H2)
    w3, b3 = lin(ks[4], ks[5], H2, output_size)
    return w1, b1, w2, b2, w3, b3


def fcout_reference(x, w1, b1, w2, b2, w3, b3):
    h = _leaky_relu(x @ w1 + b1)
    h = _leaky_relu(h @ w2 + b2)
    return h @ w3 + b3


if __name__ == "__main__":
    key = jax.random.PRNGKey(0)
    k_x, k_p = jax.random.split(key)

    # Deliberately awkward small sizes: non-multiple-of-8 batch, 32-lane
    # input, 16-lane output.  No HBM padding passes are needed: ragged batch
    # and narrow feature dims are handled by the grid / full-extent blocks.
    batch, input_size, output_size = 13, 32, 16
    x = jax.random.normal(k_x, (batch, input_size), jnp.float32)
    raw_params = init_params(k_p, input_size, output_size)

    ref = fcout_reference(x, *raw_params)

    # Exact f32 compute path.
    p_f32 = prepare_params(*raw_params, compute_dtype=jnp.float32)
    out_f32 = jax.block_until_ready(fcout_forward(x, p_f32))
    assert out_f32.shape == (batch, output_size)
    assert out_f32.dtype == x.dtype
    assert jnp.allclose(out_f32, ref, atol=1e-5, rtol=1e-5), "f32 mismatch"

    # Default bf16-weight path (f32 accumulation + f32 bias/LeakyReLU);
    # halves weight/x HBM traffic on every TPU generation.
    p_bf16 = prepare_params(*raw_params)
    out_bf16 = jax.block_until_ready(fcout_forward(x, p_bf16))
    assert out_bf16.shape == (batch, output_size)
    assert out_bf16.dtype == x.dtype
    assert jnp.allclose(out_bf16, ref, atol=5e-2, rtol=5e-2), "bf16 mismatch"

    print("KERNEL_OK")
</pallas_src>

<mosaic_0001>
module attributes {stable_mosaic.version = 11 : i64} {
  func.func @fcout_kernel(%arg0: i32, %arg1: memref<16x32xf32, #tpu.memory_space<vmem>>, %arg2: memref<32x256xf32, #tpu.memory_space<vmem>>, %arg3: memref<1x256xf32, #tpu.memory_space<vmem>>, %arg4: memref<256x128xf32, #tpu.memory_space<vmem>>, %arg5: memref<1x128xf32, #tpu.memory_space<vmem>>, %arg6: memref<128x16xf32, #tpu.memory_space<vmem>>, %arg7: memref<1x16xf32, #tpu.memory_space<vmem>>, %arg8: memref<16x16xf32, #tpu.memory_space<vmem>>) attributes {dimension_semantics = [#tpu.dimension_semantics<parallel>], iteration_bounds = array<i64: 1>, scalar_prefetch = 0 : i64, scratch_operands = 0 : i64, tpu.core_type = #tpu.core_type<tc>, window_params = [{transform_indices = @transform_0, window_bounds = array<i64: 16, 32>}, {pipeline_mode = #tpu.pipeline_mode<synchronous>, transform_indices = @transform_1, window_bounds = array<i64: 32, 256>}, {pipeline_mode = #tpu.pipeline_mode<synchronous>, transform_indices = @transform_2, window_bounds = array<i64: 1, 256>}, {pipeline_mode = #tpu.pipeline_mode<synchronous>, transform_indices = @transform_3, window_bounds = array<i64: 256, 128>}, {pipeline_mode = #tpu.pipeline_mode<synchronous>, transform_indices = @transform_4, window_bounds = array<i64: 1, 128>}, {pipeline_mode = #tpu.pipeline_mode<synchronous>, transform_indices = @transform_5, window_bounds = array<i64: 128, 16>}, {pipeline_mode = #tpu.pipeline_mode<synchronous>, transform_indices = @transform_6, window_bounds = array<i64: 1, 16>}, {transform_indices = @transform_7, window_bounds = array<i64: 16, 16>}]} {
    %c0 = arith.constant 0 : index
    %c0_0 = arith.constant 0 : index
    %0 = vector.load %arg1[%c0, %c0_0] : memref<16x32xf32, #tpu.memory_space<vmem>>, vector<16x32xf32>
    %c0_1 = arith.constant 0 : index
    %c0_2 = arith.constant 0 : index
    %1 = vector.load %arg2[%c0_1, %c0_2] : memref<32x256xf32, #tpu.memory_space<vmem>>, vector<32x256xf32>
    %cst = arith.constant dense<0.000000e+00> : vector<16x256xf32>
    %2 = tpu.matmul %0, %1, %cst {dimension_numbers = #tpu.dot_dimension_numbers<[1], [0], [0], [1], [0, 0, 1, 1], [], []>} : vector<16x32xf32>, vector<32x256xf32>, vector<16x256xf32> -> vector<16x256xf32>
    %c0_3 = arith.constant 0 : index
    %c0_4 = arith.constant 0 : index
    %3 = vector.load %arg3[%c0_3, %c0_4] : memref<1x256xf32, #tpu.memory_space<vmem>>, vector<1x256xf32>
    %4 = vector.broadcast %3 : vector<1x256xf32> to vector<16x256xf32>
    %5 = arith.addf %2, %4 : vector<16x256xf32>
    %cst_5 = arith.constant 0.000000e+00 : f32
    %6 = vector.broadcast %cst_5 : f32 to vector<16x256xf32>
    %7 = arith.cmpf ogt, %5, %6 : vector<16x256xf32>
    %cst_6 = arith.constant 0.00999999977 : f32
    %8 = vector.broadcast %cst_6 : f32 to vector<16x256xf32>
    %9 = arith.mulf %8, %5 : vector<16x256xf32>
    %10 = arith.select %7, %5, %9 : vector<16x256xi1>, vector<16x256xf32>
    %c0_7 = arith.constant 0 : index
    %c0_8 = arith.constant 0 : index
    %11 = vector.load %arg4[%c0_7, %c0_8] : memref<256x128xf32, #tpu.memory_space<vmem>>, vector<256x128xf32>
    %cst_9 = arith.constant dense<0.000000e+00> : vector<16x128xf32>
    %12 = tpu.matmul %10, %11, %cst_9 {dimension_numbers = #tpu.dot_dimension_numbers<[1], [0], [0], [1], [0, 0, 1, 1], [], []>} : vector<16x256xf32>, vector<256x128xf32>, vector<16x128xf32> -> vector<16x128xf32>
    %c0_10 = arith.constant 0 : index
    %c0_11 = arith.constant 0 : index
    %13 = vector.load %arg5[%c0_10, %c0_11] : memref<1x128xf32, #tpu.memory_space<vmem>>, vector<1x128xf32>
    %14 = vector.broadcast %13 : vector<1x128xf32> to vector<16x128xf32>
    %15 = arith.addf %12, %14 : vector<16x128xf32>
    %cst_12 = arith.constant 0.000000e+00 : f32
    %16 = vector.broadcast %cst_12 : f32 to vector<16x128xf32>
    %17 = arith.cmpf ogt, %15, %16 : vector<16x128xf32>
    %cst_13 = arith.constant 0.00999999977 : f32
    %18 = vector.broadcast %cst_13 : f32 to vector<16x128xf32>
    %19 = arith.mulf %18, %15 : vector<16x128xf32>
    %20 = arith.select %17, %15, %19 : vector<16x128xi1>, vector<16x128xf32>
    %c0_14 = arith.constant 0 : index
    %c0_15 = arith.constant 0 : index
    %21 = vector.load %arg6[%c0_14, %c0_15] : memref<128x16xf32, #tpu.memory_space<vmem>>, vector<128x16xf32>
    %cst_16 = arith.constant dense<0.000000e+00> : vector<16x16xf32>
    %22 = tpu.matmul %20, %21, %cst_16 {dimension_numbers = #tpu.dot_dimension_numbers<[1], [0], [0], [1], [0, 0, 1, 1], [], []>} : vector<16x128xf32>, vector<128x16xf32>, vector<16x16xf32> -> vector<16x16xf32>
    %c0_17 = arith.constant 0 : index
    %c0_18 = arith.constant 0 : index
    %23 = vector.load %arg7[%c0_17, %c0_18] : memref<1x16xf32, #tpu.memory_space<vmem>>, vector<1x16xf32>
    %24 = vector.broadcast %23 : vector<1x16xf32> to vector<16x16xf32>
    %25 = arith.addf %22, %24 : vector<16x16xf32>
    %c0_19 = arith.constant 0 : index
    %c0_20 = arith.constant 0 : index
    %26 = vector.load %arg8[%c0_19, %c0_20] : memref<16x16xf32, #tpu.memory_space<vmem>>, vector<16x16xf32>
    tpu.vector_store %arg8[%c0_19, %c0_20], %25 {strides = array<i32>} : memref<16x16xf32, #tpu.memory_space<vmem>>, vector<16x16xf32>,
    return
  }
  func.func @transform_0(%arg0: i32) -> (i32, i32) {
    %c0_i32 = arith.constant 0 : i32
    %c0_i32_0 = arith.constant 0 : i32
    return %arg0, %c0_i32 : i32, i32
  }
  func.func @transform_1(%arg0: i32) -> (i32, i32) {
    %c0_i32 = arith.constant 0 : i32
    %c0_i32_0 = arith.constant 0 : i32
    %c0_i32_1 = arith.constant 0 : i32
    return %c0_i32, %c0_i32_0 : i32, i32
  }
  func.func @transform_2(%arg0: i32) -> (i32, i32) {
    %c0_i32 = arith.constant 0 : i32
    %c0_i32_0 = arith.constant 0 : i32
    %c0_i32_1 = arith.constant 0 : i32
    return %c0_i32, %c0_i32_0 : i32, i32
  }
  func.func @transform_3(%arg0: i32) -> (i32, i32) {
    %c0_i32 = arith.constant 0 : i32
    %c0_i32_0 = arith.constant 0 : i32
    %c0_i32_1 = arith.constant 0 : i32
    return %c0_i32, %c0_i32_0 : i32, i32
  }
  func.func @transform_4(%arg0: i32) -> (i32, i32) {
    %c0_i32 = arith.constant 0 : i32
    %c0_i32_0 = arith.constant 0 : i32
    %c0_i32_1 = arith.constant 0 : i32
    return %c0_i32, %c0_i32_0 : i32, i32
  }
  func.func @transform_5(%arg0: i32) -> (i32, i32) {
    %c0_i32 = arith.constant 0 : i32
    %c0_i32_0 = arith.constant 0 : i32
    %c0_i32_1 = arith.constant 0 : i32
    return %c0_i32, %c0_i32_0 : i32, i32
  }
  func.func @transform_6(%arg0: i32) -> (i32, i32) {
    %c0_i32 = arith.constant 0 : i32
    %c0_i32_0 = arith.constant 0 : i32
    %c0_i32_1 = arith.constant 0 : i32
    return %c0_i32, %c0_i32_0 : i32, i32
  }
  func.func @transform_7(%arg0: i32) -> (i32, i32) {
    %c0_i32 = arith.constant 0 : i32
    %c0_i32_0 = arith.constant 0 : i32
    return %arg0, %c0_i32 : i32, i32
  }
}

module attributes {stable_mosaic.version = 11 : i64} {
  func.func @fcout_kernel(%arg0: i32, %arg1: memref<16x32xf32, #tpu.memory_space<vmem>>, %arg2: memref<32x256xf32, #tpu.memory_space<vmem>>, %arg3: memref<1x256xf32, #tpu.memory_space<vmem>>, %arg4: memref<256x128xf32, #tpu.memory_space<vmem>>, %arg5: memref<1x128xf32, #tpu.memory_space<vmem>>, %arg6: memref<128x16xf32, #tpu.memory_space<vmem>>, %arg7: memref<1x16xf32, #tpu.memory_space<vmem>>, %arg8: memref<16x16xf32, #tpu.memory_space<vmem>>) attributes {dimension_semantics = [#tpu.dimension_semantics<parallel>], iteration_bounds = array<i64: 1>, scalar_prefetch = 0 : i64, scratch_operands = 0 : i64, tpu.core_type = #tpu.core_type<tc>, window_params = [{transform_indices = @transform_0, window_bounds = array<i64: 16, 32>}, {pipeline_mode = #tpu.pipeline_mode<synchronous>, transform_indices = @transform_1, window_bounds = array<i64: 32, 256>}, {pipeline_mode = #tpu.pipeline_mode<synchronous>, transform_indices = @transform_2, window_bounds = array<i64: 1, 256>}, {pipeline_mode = #tpu.pipeline_mode<synchronous>, transform_indices = @transform_3, window_bounds = array<i64: 256, 128>}, {pipeline_mode = #tpu.pipeline_mode<synchronous>, transform_indices = @transform_4, window_bounds = array<i64: 1, 128>}, {pipeline_mode = #tpu.pipeline_mode<synchronous>, transform_indices = @transform_5, window_bounds = array<i64: 128, 16>}, {pipeline_mode = #tpu.pipeline_mode<synchronous>, transform_indices = @transform_6, window_bounds = array<i64: 1, 16>}, {transform_indices = @transform_7, window_bounds = array<i64: 16, 16>}]} {
    %c0 = arith.constant 0 : index
    %c0_0 = arith.constant 0 : index
    %0 = vector.load %arg1[%c0, %c0_0] : memref<16x32xf32, #tpu.memory_space<vmem>>, vector<16x32xf32>
    %c0_1 = arith.constant 0 : index
    %c0_2 = arith.constant 0 : index
    %1 = vector.load %arg2[%c0_1, %c0_2] : memref<32x256xf32, #tpu.memory_space<vmem>>, vector<32x256xf32>
    %cst = arith.constant dense<0.000000e+00> : vector<16x256xf32>
    %2 = tpu.matmul %0, %1, %cst {dimension_numbers = #tpu.dot_dimension_numbers<[1], [0], [0], [1], [0, 0, 1, 1], [], []>} : vector<16x32xf32>, vector<32x256xf32>, vector<16x256xf32> -> vector<16x256xf32>
    %c0_3 = arith.constant 0 : index
    %c0_4 = arith.constant 0 : index
    %3 = vector.load %arg3[%c0_3, %c0_4] : memref<1x256xf32, #tpu.memory_space<vmem>>, vector<1x256xf32>
    %4 = vector.broadcast %3 : vector<1x256xf32> to vector<16x256xf32>
    %5 = arith.addf %2, %4 : vector<16x256xf32>
    %cst_5 = arith.constant 0.000000e+00 : f32
    %6 = vector.broadcast %cst_5 : f32 to vector<16x256xf32>
    %7 = arith.cmpf ogt, %5, %6 : vector<16x256xf32>
    %cst_6 = arith.constant 0.00999999977 : f32
    %8 = vector.broadcast %cst_6 : f32 to vector<16x256xf32>
    %9 = arith.mulf %8, %5 : vector<16x256xf32>
    %10 = arith.select %7, %5, %9 : vector<16x256xi1>, vector<16x256xf32>
    %c0_7 = arith.constant 0 : index
    %c0_8 = arith.constant 0 : index
    %11 = vector.load %arg4[%c0_7, %c0_8] : memref<256x128xf32, #tpu.memory_space<vmem>>, vector<256x128xf32>
    %cst_9 = arith.constant dense<0.000000e+00> : vector<16x128xf32>
    %12 = tpu.matmul %10, %11, %cst_9 {dimension_numbers = #tpu.dot_dimension_numbers<[1], [0], [0], [1], [0, 0, 1, 1], [], []>} : vector<16x256xf32>, vector<256x128xf32>, vector<16x128xf32> -> vector<16x128xf32>
    %c0_10 = arith.constant 0 : index
    %c0_11 = arith.constant 0 : index
    %13 = vector.load %arg5[%c0_10, %c0_11] : memref<1x128xf32, #tpu.memory_space<vmem>>, vector<1x128xf32>
    %14 = vector.broadcast %13 : vector<1x128xf32> to vector<16x128xf32>
    %15 = arith.addf %12, %14 : vector<16x128xf32>
    %cst_12 = arith.constant 0.000000e+00 : f32
    %16 = vector.broadcast %cst_12 : f32 to vector<16x128xf32>
    %17 = arith.cmpf ogt, %15, %16 : vector<16x128xf32>
    %cst_13 = arith.constant 0.00999999977 : f32
    %18 = vector.broadcast %cst_13 : f32 to vector<16x128xf32>
    %19 = arith.mulf %18, %15 : vector<16x128xf32>
    %20 = arith.select %17, %15, %19 : vector<16x128xi1>, vector<16x128xf32>
    %c0_14 = arith.constant 0 : index
    %c0_15 = arith.constant 0 : index
    %21 = vector.load %arg6[%c0_14, %c0_15] : memref<128x16xf32, #tpu.memory_space<vmem>>, vector<128x16xf32>
    %cst_16 = arith.constant dense<0.000000e+00> : vector<16x16xf32>
    %22 = tpu.matmul %20, %21, %cst_16 {dimension_numbers = #tpu.dot_dimension_numbers<[1], [0], [0], [1], [0, 0, 1, 1], [], []>} : vector<16x128xf32>, vector<128x16xf32>, vector<16x16xf32> -> vector<16x16xf32>
    %c0_17 = arith.constant 0 : index
    %c0_18 = arith.constant 0 : index
    %23 = vector.load %arg7[%c0_17, %c0_18] : memref<1x16xf32, #tpu.memory_space<vmem>>, vector<1x16xf32>
    %24 = vector.broadcast %23 : vector<1x16xf32> to vector<16x16xf32>
    %25 = arith.addf %22, %24 : vector<16x16xf32>
    %c0_19 = arith.constant 0 : index
    %c0_20 = arith.constant 0 : index
    %26 = vector.load %arg8[%c0_19, %c0_20] : memref<16x16xf32, #tpu.memory_space<vmem>>, vector<16x16xf32>
    tpu.vector_store %arg8[%c0_19, %c0_20], %25 {strides = array<i32>} : memref<16x16xf32, #tpu.memory_space<vmem>>, vector<16x16xf32>,
    return
  }
  func.func @transform_0(%arg0: i32) -> (i32, i32) {
    %c0_i32 = arith.constant 0 : i32
    %c0_i32_0 = arith.constant 0 : i32
    return %arg0, %c0_i32 : i32, i32
  }
  func.func @transform_1(%arg0: i32) -> (i32, i32) {
    %c0_i32 = arith.constant 0 : i32
    %c0_i32_0 = arith.constant 0 : i32
    %c0_i32_1 = arith.constant 0 : i32
    return %c0_i32, %c0_i32_0 : i32, i32
  }
  func.func @transform_2(%arg0: i32) -> (i32, i32) {
    %c0_i32 = arith.constant 0 : i32
    %c0_i32_0 = arith.constant 0 : i32
    %c0_i32_1 = arith.constant 0 : i32
    return %c0_i32, %c0_i32_0 : i32, i32
  }
  func.func @transform_3(%arg0: i32) -> (i32, i32) {
    %c0_i32 = arith.constant 0 : i32
    %c0_i32_0 = arith.constant 0 : i32
    %c0_i32_1 = arith.constant 0 : i32
    return %c0_i32, %c0_i32_0 : i32, i32
  }
  func.func @transform_4(%arg0: i32) -> (i32, i32) {
    %c0_i32 = arith.constant 0 : i32
    %c0_i32_0 = arith.constant 0 : i32
    %c0_i32_1 = arith.constant 0 : i32
    return %c0_i32, %c0_i32_0 : i32, i32
  }
  func.func @transform_5(%arg0: i32) -> (i32, i32) {
    %c0_i32 = arith.constant 0 : i32
    %c0_i32_0 = arith.constant 0 : i32
    %c0_i32_1 = arith.constant 0 : i32
    return %c0_i32, %c0_i32_0 : i32, i32
  }
  func.func @transform_6(%arg0: i32) -> (i32, i32) {
    %c0_i32 = arith.constant 0 : i32
    %c0_i32_0 = arith.constant 0 : i32
    %c0_i32_1 = arith.constant 0 : i32
    return %c0_i32, %c0_i32_0 : i32, i32
  }
  func.func @transform_7(%arg0: i32) -> (i32, i32) {
    %c0_i32 = arith.constant 0 : i32
    %c0_i32_0 = arith.constant 0 : i32
    return %arg0, %c0_i32 : i32, i32
  }
}

</mosaic_0001>

<llo_original>
// kernel: _fcout_call.1
$region0: #{_fcout_call.1}
  #allocation0 [shape = 'u32[]', space=smem, size = 0x4, offset = 0x4, fixed_abs, tag = 'smem constant byte address 0x4 - core index']
  #allocation1 [shape = 'u32[144,128]{1,0:T(1,128)}', space=vmem, size = 0x12000, scoped, tag = 'internal scratch']
  %s0 = inlined_call_operand.vmem [shape: f32[13,32], index: 0, kind: input, shape index: {}]
  %s1 = inlined_call_operand.vmem [shape: f32[32,256], index: 1, kind: input, shape index: {}]
  %s2 = inlined_call_operand.vmem [shape: f32[1,256], index: 2, kind: input, shape index: {}]
  %s3 = inlined_call_operand.hbm [shape: f32[256,128], index: 3, kind: input, shape index: {}]
  %s4 = inlined_call_operand.vmem [shape: f32[1,128], index: 4, kind: input, shape index: {}]
  %s5 = inlined_call_operand.vmem [shape: f32[128,16], index: 5, kind: input, shape index: {}]
  %s6 = inlined_call_operand.vmem [shape: f32[1,16], index: 6, kind: input, shape index: {}]
  %s7 = inlined_call_operand.hbm [shape: f32[13,16], index: 7, kind: output, shape index: {}]
  %s8 = sld [smem:[#allocation0]]
  $region42: #{_fcout_call.1} parent=0
    _
  %s10 = ssub.s32 1, %s8
  %s11 = scalar_select 0, %s10, %s8
  $region1: #{_fcout_call.1} parent=0
    #allocation2 [shape = 'u8[131072]{0}', space=vmem, size = 0x20000, scoped, tag = 'input window, operand 3, single buffered']
    #allocation3 [shape = 's32[1]{0}', space=sflag, size = 0x4, scoped, tag = 'scoped memory for _fcout_call.1']
    #allocation4 [shape = 's32[1]{0}', space=sflag, size = 0x4, scoped, tag = 'scoped memory for _fcout_call.1']
    #allocation5 [shape = 'u8[8192]{0}', space=vmem, size = 0x2000, scoped, tag = 'output window, operand 0, single buffered']
    %12 = vsyncpa [#allocation3], 0
    %13 = vsyncpa [#allocation4], 0
    // Predicated region
    $region2: #{_fcout_call.1} parent=1 // pred_check
      _
    $region3: #{_fcout_call.1} parent=1 // pred_check_branch
      %15 = sbr.rel (0) target = $region5
    $region4: #{_fcout_call.1} parent=1 // pred_region
      _
    $region5: #{_fcout_call.1} parent=1 // pred_fallthru
      _
    // Predicated region
    $region6: #{_fcout_call.1} parent=1 // pred_check
      _
    $region7: #{_fcout_call.1} parent=1 // pred_check_branch
      %17 = sbr.rel (0) target = $region9
    $region8: #{_fcout_call.1} parent=1 // pred_region
      _
    $region9: #{_fcout_call.1} parent=1 // pred_fallthru
      _
    // Predicated region
    $region10: #{_fcout_call.1} parent=1 // pred_check
      _
    $region11: #{_fcout_call.1} parent=1 // pred_check_branch
      %19 = sbr.rel (0) target = $region13
    $region12: #{_fcout_call.1} parent=1 // pred_region
      _
    $region13: #{_fcout_call.1} parent=1 // pred_fallthru
      _
    // Predicated region
    $region14: #{_fcout_call.1} parent=1 // pred_check
      _
    $region15: #{_fcout_call.1} parent=1 // pred_check_branch
      %21 = sbr.rel (0) target = $region17
    $region16: #{_fcout_call.1} parent=1 // pred_region
      %s23 = ssub.s32 4096, 4096
      %24 = vsyncadd [#allocation3], %s23
      %s25 = sshll.u32 [#allocation2], 4
      %s26 = int_to_ptr.vmem [resolvable:$true] %s25
      %31 = dma.hbm_to_vmem [thread:$0]  %s3, 4096, %s26, [#allocation3], 128, 128, 8
    $region17: #{_fcout_call.1} parent=1 // pred_fallthru
      _
    // Predicated region
    $region18: #{_fcout_call.1} parent=1 // pred_check
      _
    $region19: #{_fcout_call.1} parent=1 // pred_check_branch
      %33 = sbr.rel (0) target = $region21
    $region20: #{_fcout_call.1} parent=1 // pred_region
      _
    $region21: #{_fcout_call.1} parent=1 // pred_fallthru
      _
    // Predicated region
    $region22: #{_fcout_call.1} parent=1 // pred_check
      _
    $region23: #{_fcout_call.1} parent=1 // pred_check_branch
      %35 = sbr.rel (0) target = $region25
    $region24: #{_fcout_call.1} parent=1 // pred_region
      _
    $region25: #{_fcout_call.1} parent=1 // pred_fallthru
      _
    // Predicated region
    $region26: #{_fcout_call.1} parent=1 // pred_check
      _
    $region27: #{_fcout_call.1} parent=1 // pred_check_branch
      %37 = sbr.rel (0) target = $region29
    $region28: #{_fcout_call.1} parent=1 // pred_region
      _
    $region29: #{_fcout_call.1} parent=1 // pred_fallthru
      _
    // Predicated region
    $region30: #{_fcout_call.1} parent=1 // pred_check
      _
    $region31: #{_fcout_call.1} parent=1 // pred_check_branch
      %39 = sbr.rel (0) target = $region33
    $region32: #{_fcout_call.1} parent=1 // pred_region
      %40 = dma.done [#allocation3], 4096
    $region33: #{_fcout_call.1} parent=1 // pred_fallthru
      _
    %v41 = vld [vmem:[%s0] sm:$0xff]
    %v42 = vld [vmem:[%s0 + $0x8] sm:$0xff]
    %v43 = vld [vmem:[%s1] sm:$0xff]
    %v44 = vld [vmem:[%s1 + $0x8] sm:$0xff]
    %v45 = vld [vmem:[%s1 + $0x10] sm:$0xff]
    %v46 = vld [vmem:[%s1 + $0x18] sm:$0xff]
    %v47 = vld [vmem:[%s1 + $0x20] sm:$0xff]
    %v48 = vld [vmem:[%s1 + $0x28] sm:$0xff]
    %v49 = vld [vmem:[%s1 + $0x30] sm:$0xff]
    %v50 = vld [vmem:[%s1 + $0x38] sm:$0xff]
    %v51 = vld [vmem:[%s2] sm:$0x3]
    %v53 = vlaneseq
    %v54 = vshrl.u32 %v53, 7
    %v55 = vsub.s32 0, %v54
    %v56 = vrot.slane %v51, %v55
    %v57 = vlaneseq
    %v58 = vshrl.u32 %v57, 7
    %v59 = vsub.s32 1, %v58
    %v60 = vrot.slane %v51, %v59
    %vm63 = vcmask 261120
    %v65 = vsel %vm63, %v41, 0
    %v68 = vsel %vm63, %v42, 0
    %70 = vmatprep.subr.mxu0 0.0
    %71 = vmatpush1.msra.mxu0 0.0
    %72 = vmatprep.subr.mxu0 0.0
    %73 = vmatpush1.msra.mxu0 0.0
    %74 = vmatprep.subr.mxu0 0.0
    %75 = vmatpush1.msra.mxu0 0.0
    %76 = vmatprep.subr.mxu0 0.0
    %77 = vmatpush1.msra.mxu0 0.0
    %78 = vmatprep.subr.mxu0 0.0
    %79 = vmatpush1.msra.mxu0 0.0
    %80 = vmatprep.subr.mxu0 0.0
    %81 = vmatpush1.msra.mxu0 0.0
    %82 = vmatprep.subr.mxu0 0.0
    %83 = vmatpush1.msra.mxu0 0.0
    %84 = vmatprep.subr.mxu0 0.0
    %85 = vmatpush1.msra.mxu0 0.0
    %86 = vmatprep.subr.mxu0 0.0
    %87 = vmatpush1.msra.mxu0 0.0
    %88 = vmatprep.subr.mxu0 0.0
    %89 = vmatpush1.msra.mxu0 0.0
    %90 = vmatprep.subr.mxu0 0.0
    %91 = vmatpush1.msra.mxu0 0.0
    %92 = vmatprep.subr.mxu0 0.0
    %93 = vmatpush1.msra.mxu0 0.0
    %94 = vmatprep.subr.mxu0 %v50
    %95 = vmatpush1.msra.mxu0 %v49
    %96 = vmatprep.subr.mxu0 %v48
    %97 = vmatpush1.msra.mxu0 %v47
    %98 = vmatprep.subr.mxu0 %v46
    %99 = vmatpush1.msra.mxu0 %v45
    %100 = vmatprep.subr.mxu0 %v44
    %101 = vmatpush1.msra.mxu0 %v43
    %102 = vmatprep.subr.mxu0 0.0
    %103 = vmatpush2.msra.mxu0 0.0
    %104 = vmatprep.subr.mxu0 0.0
    %105 = vmatpush2.msra.mxu0 0.0
    %106 = vmatprep.subr.mxu0 0.0
    %107 = vmatpush2.msra.mxu0 0.0
    %108 = vmatprep.subr.mxu0 0.0
    %109 = vmatpush2.msra.mxu0 0.0
    %110 = vmatprep.subr.mxu0 0.0
    %111 = vmatpush2.msra.mxu0 0.0
    %112 = vmatprep.subr.mxu0 0.0
    %113 = vmatpush2.msra.mxu0 0.0
    %114 = vmatprep.subr.mxu0 0.0
    %115 = vmatpush2.msra.mxu0 0.0
    %116 = vmatprep.subr.mxu0 0.0
    %117 = vmatpush2.msra.mxu0 0.0
    %118 = vmatprep.subr.mxu0 0.0
    %119 = vmatpush2.msra.mxu0 0.0
    %120 = vmatprep.subr.mxu0 0.0
    %121 = vmatpush2.msra.mxu0 0.0
    %122 = vmatprep.subr.mxu0 0.0
    %123 = vmatpush2.msra.mxu0 0.0
    %124 = vmatprep.subr.mxu0 0.0
    %125 = vmatpush2.msra.mxu0 0.0
    %126 = vmatprep.subr.mxu0 0.0
    %127 = vmatpush2.msra.mxu0 0.0
    %128 = vmatprep.subr.mxu0 0.0
    %129 = vmatpush2.msra.mxu0 0.0
    %130 = vmatprep.subr.mxu0 0.0
    %131 = vmatpush2.msra.mxu0 0.0
    %132 = vmatprep.subr.mxu0 0.0
    %133 = vmatpush2.msra.mxu0 0.0
    %134 = vmatprep.mubr.f32.mxu0 0.0
    %135 = vmatmul.mubr.f32.gmra.mxu0 %v65
    %v136 = vpop.f32.mrf.mxu0
    %v137 = vadd.f32 %v56, %v136
    %v138 = vpop.f32.mrf.mxu0
    %v139 = vadd.f32 %v60, %v138
    %140 = vmatprep.mubr.f32.mxu0 0.0
    %141 = vmatmul.mubr.f32.gmra.mxu0 %v68
    %v142 = vpop.f32.mrf.mxu0
    %v143 = vadd.f32 %v56, %v142
    %v144 = vpop.f32.mrf.mxu0
    %v145 = vadd.f32 %v60, %v144
    %146 = vdwg.mxu0
    %vm147 = vcmp.gt.f32.partialorder %v137, 0.0
    %vm148 = vcmp.gt.f32.partialorder %v139, 0.0
    %vm149 = vcmp.gt.f32.partialorder %v143, 0.0
    %vm150 = vcmp.gt.f32.partialorder %v145, 0.0
    %v151 = vmul.f32 %v137, 0.01
    %v152 = vmul.f32 %v139, 0.01
    %v153 = vmul.f32 %v143, 0.01
    %v154 = vmul.f32 %v145, 0.01
    %v155 = vsel %vm147, %v137, %v151
    %v156 = vsel %vm148, %v139, %v152
    %v157 = vsel %vm149, %v143, %v153
    %v158 = vsel %vm150, %v145, %v154
    %v159 = vld [vmem:[#allocation2] sm:$0xff]
    %v160 = vld [vmem:[#allocation2 + $0x8] sm:$0xff]
    %v161 = vld [vmem:[#allocation2 + $0x10] sm:$0xff]
    %v162 = vld [vmem:[#allocation2 + $0x18] sm:$0xff]
    %v163 = vld [vmem:[#allocation2 + $0x20] sm:$0xff]
    %v164 = vld [vmem:[#allocation2 + $0x28] sm:$0xff]
    %v165 = vld [vmem:[#allocation2 + $0x30] sm:$0xff]
    %v166 = vld [vmem:[#allocation2 + $0x38] sm:$0xff]
    %v167 = vld [vmem:[#allocation2 + $0x40] sm:$0xff]
    %v168 = vld [vmem:[#allocation2 + $0x48] sm:$0xff]
    %v169 = vld [vmem:[#allocation2 + $0x50] sm:$0xff]
    %v170 = vld [vmem:[#allocation2 + $0x58] sm:$0xff]
    %v171 = vld [vmem:[#allocation2 + $0x60] sm:$0xff]
    %v172 = vld [vmem:[#allocation2 + $0x68] sm:$0xff]
    %v173 = vld [vmem:[#allocation2 + $0x70] sm:$0xff]
    %v174 = vld [vmem:[#allocation2 + $0x78] sm:$0xff]
    %v175 = vld [vmem:[#allocation2 + $0x80] sm:$0xff]
    %v176 = vld [vmem:[#allocation2 + $0x88] sm:$0xff]
    %v177 = vld [vmem:[#allocation2 + $0x90] sm:$0xff]
    %v178 = vld [vmem:[#allocation2 + $0x98] sm:$0xff]
    %v179 = vld [vmem:[#allocation2 + $0xa0] sm:$0xff]
    %v180 = vld [vmem:[#allocation2 + $0xa8] sm:$0xff]
    %v181 = vld [vmem:[#allocation2 + $0xb0] sm:$0xff]
    %v182 = vld [vmem:[#allocation2 + $0xb8] sm:$0xff]
    %v183 = vld [vmem:[#allocation2 + $0xc0] sm:$0xff]
    %v184 = vld [vmem:[#allocation2 + $0xc8] sm:$0xff]
    %v185 = vld [vmem:[#allocation2 + $0xd0] sm:$0xff]
    %v186 = vld [vmem:[#allocation2 + $0xd8] sm:$0xff]
    %v187 = vld [vmem:[#allocation2 + $0xe0] sm:$0xff]
    %v188 = vld [vmem:[#allocation2 + $0xe8] sm:$0xff]
    %v189 = vld [vmem:[#allocation2 + $0xf0] sm:$0xff]
    %v190 = vld [vmem:[#allocation2 + $0xf8] sm:$0xff]
    %v191 = vld [vmem:[%s4] sm:$0x1]
    %v193 = vlaneseq
    %v194 = vshrl.u32 %v193, 7
    %v195 = vsub.s32 0, %v194
    %v196 = vrot.slane %v191, %v195
    %198 = vmatprep.subr.mxu0 0.0
    %199 = vmatpush1.msra.mxu0 %v174
    %200 = vmatprep.subr.mxu0 0.0
    %201 = vmatpush1.msra.mxu0 %v173
    %202 = vmatprep.subr.mxu0 0.0
    %203 = vmatpush1.msra.mxu0 %v172
    %204 = vmatprep.subr.mxu0 0.0
    %205 = vmatpush1.msra.mxu0 %v171
    %206 = vmatprep.subr.mxu0 0.0
    %207 = vmatpush1.msra.mxu0 %v170
    %208 = vmatprep.subr.mxu0 0.0
    %209 = vmatpush1.msra.mxu0 %v169
    %210 = vmatprep.subr.mxu0 0.0
    %211 = vmatpush1.msra.mxu0 %v168
    %212 = vmatprep.subr.mxu0 0.0
    %213 = vmatpush1.msra.mxu0 %v167
    %214 = vmatprep.subr.mxu0 0.0
    %215 = vmatpush1.msra.mxu0 %v166
    %216 = vmatprep.subr.mxu0 0.0
    %217 = vmatpush1.msra.mxu0 %v165
    %218 = vmatprep.subr.mxu0 0.0
    %219 = vmatpush1.msra.mxu0 %v164
    %220 = vmatprep.subr.mxu0 0.0
    %221 = vmatpush1.msra.mxu0 %v163
    %222 = vmatprep.subr.mxu0 0.0
    %223 = vmatpush1.msra.mxu0 %v162
    %224 = vmatprep.subr.mxu0 0.0
    %225 = vmatpush1.msra.mxu0 %v161
    %226 = vmatprep.subr.mxu0 0.0
    %227 = vmatpush1.msra.mxu0 %v160
    %228 = vmatprep.subr.mxu0 0.0
    %229 = vmatpush1.msra.mxu0 %v159
    %230 = vmatprep.subr.mxu0 0.0
    %231 = vmatpush2.msra.mxu0 %v190
    %232 = vmatprep.subr.mxu0 0.0
    %233 = vmatpush2.msra.mxu0 %v189
    %234 = vmatprep.subr.mxu0 0.0
    %235 = vmatpush2.msra.mxu0 %v188
    %236 = vmatprep.subr.mxu0 0.0
    %237 = vmatpush2.msra.mxu0 %v187
    %238 = vmatprep.subr.mxu0 0.0
    %239 = vmatpush2.msra.mxu0 %v186
    %240 = vmatprep.subr.mxu0 0.0
    %241 = vmatpush2.msra.mxu0 %v185
    %242 = vmatprep.subr.mxu0 0.0
    %243 = vmatpush2.msra.mxu0 %v184
    %244 = vmatprep.subr.mxu0 0.0
    %245 = vmatpush2.msra.mxu0 %v183
    %246 = vmatprep.subr.mxu0 0.0
    %247 = vmatpush2.msra.mxu0 %v182
    %248 = vmatprep.subr.mxu0 0.0
    %249 = vmatpush2.msra.mxu0 %v181
    %250 = vmatprep.subr.mxu0 0.0
    %251 = vmatpush2.msra.mxu0 %v180
    %252 = vmatprep.subr.mxu0 0.0
    %253 = vmatpush2.msra.mxu0 %v179
    %254 = vmatprep.subr.mxu0 0.0
    %255 = vmatpush2.msra.mxu0 %v178
    %256 = vmatprep.subr.mxu0 0.0
    %257 = vmatpush2.msra.mxu0 %v177
    %258 = vmatprep.subr.mxu0 0.0
    %259 = vmatpush2.msra.mxu0 %v176
    %260 = vmatprep.subr.mxu0 0.0
    %261 = vmatpush2.msra.mxu0 %v175
    %262 = vmatprep.mubr.f32.mxu0 %v156
    %263 = vmatmul.mubr.f32.gmra.mxu0 %v155
    %v264 = vpop.f32.mrf.mxu0
    %v265 = vadd.f32 %v196, %v264
    %v266 = vpop.f32.mrf.mxu0
    %267 = vmatprep.mubr.f32.mxu0 %v158
    %268 = vmatmul.mubr.f32.gmra.mxu0 %v157
    %v269 = vpop.f32.mrf.mxu0
    %v270 = vadd.f32 %v196, %v269
    %v271 = vpop.f32.mrf.mxu0
    %272 = vdwg.mxu0
    %vm273 = vcmp.gt.f32.partialorder %v265, 0.0
    %vm274 = vcmp.gt.f32.partialorder %v270, 0.0
    %v275 = vmul.f32 %v265, 0.01
    %v276 = vmul.f32 %v270, 0.01
    %v277 = vsel %vm273, %v265, %v275
    %v278 = vsel %vm274, %v270, %v276
    %v279 = vld [vmem:[%s5] sm:$0xff]
    %v280 = vld [vmem:[%s5 + $0x8] sm:$0xff]
    %v281 = vld [vmem:[%s5 + $0x10] sm:$0xff]
    %v282 = vld [vmem:[%s5 + $0x18] sm:$0xff]
    %v283 = vld [vmem:[%s5 + $0x20] sm:$0xff]
    %v284 = vld [vmem:[%s5 + $0x28] sm:$0xff]
    %v285 = vld [vmem:[%s5 + $0x30] sm:$0xff]
    %v286 = vld [vmem:[%s5 + $0x38] sm:$0xff]
    %v287 = vld [vmem:[%s5 + $0x40] sm:$0xff]
    %v288 = vld [vmem:[%s5 + $0x48] sm:$0xff]
    %v289 = vld [vmem:[%s5 + $0x50] sm:$0xff]
    %v290 = vld [vmem:[%s5 + $0x58] sm:$0xff]
    %v291 = vld [vmem:[%s5 + $0x60] sm:$0xff]
    %v292 = vld [vmem:[%s5 + $0x68] sm:$0xff]
    %v293 = vld [vmem:[%s5 + $0x70] sm:$0xff]
    %v294 = vld [vmem:[%s5 + $0x78] sm:$0xff]
    %v295 = vld [vmem:[%s6] sm:$0x1]
    %v297 = vlaneseq
    %v298 = vshrl.u32 %v297, 7
    %v299 = vsub.s32 0, %v298
    %v300 = vrot.slane %v295, %v299
    %302 = vmatprep.subr.mxu0 0.0
    %303 = vmatpush1.msra.mxu0 %v294
    %304 = vmatprep.subr.mxu0 0.0
    %305 = vmatpush1.msra.mxu0 %v293
    %306 = vmatprep.subr.mxu0 0.0
    %307 = vmatpush1.msra.mxu0 %v292
    %308 = vmatprep.subr.mxu0 0.0
    %309 = vmatpush1.msra.mxu0 %v291
    %310 = vmatprep.subr.mxu0 0.0
    %311 = vmatpush1.msra.mxu0 %v290
    %312 = vmatprep.subr.mxu0 0.0
    %313 = vmatpush1.msra.mxu0 %v289
    %314 = vmatprep.subr.mxu0 0.0
    %315 = vmatpush1.msra.mxu0 %v288
    %316 = vmatprep.subr.mxu0 0.0
    %317 = vmatpush1.msra.mxu0 %v287
    %318 = vmatprep.subr.mxu0 0.0
    %319 = vmatpush1.msra.mxu0 %v286
    %320 = vmatprep.subr.mxu0 0.0
    %321 = vmatpush1.msra.mxu0 %v285
    %322 = vmatprep.subr.mxu0 0.0
    %323 = vmatpush1.msra.mxu0 %v284
    %324 = vmatprep.subr.mxu0 0.0
    %325 = vmatpush1.msra.mxu0 %v283
    %326 = vmatprep.subr.mxu0 0.0
    %327 = vmatpush1.msra.mxu0 %v282
    %328 = vmatprep.subr.mxu0 0.0
    %329 = vmatpush1.msra.mxu0 %v281
    %330 = vmatprep.subr.mxu0 0.0
    %331 = vmatpush1.msra.mxu0 %v280
    %332 = vmatprep.subr.mxu0 0.0
    %333 = vmatpush1.msra.mxu0 %v279
    %334 = vmatprep.subr.mxu0 0.0
    %335 = vmatpush2.msra.mxu0 0.0
    %336 = vmatprep.subr.mxu0 0.0
    %337 = vmatpush2.msra.mxu0 0.0
    %338 = vmatprep.subr.mxu0 0.0
    %339 = vmatpush2.msra.mxu0 0.0
    %340 = vmatprep.subr.mxu0 0.0
    %341 = vmatpush2.msra.mxu0 0.0
    %342 = vmatprep.subr.mxu0 0.0
    %343 = vmatpush2.msra.mxu0 0.0
    %344 = vmatprep.subr.mxu0 0.0
    %345 = vmatpush2.msra.mxu0 0.0
    %346 = vmatprep.subr.mxu0 0.0
    %347 = vmatpush2.msra.mxu0 0.0
    %348 = vmatprep.subr.mxu0 0.0
    %349 = vmatpush2.msra.mxu0 0.0
    %350 = vmatprep.subr.mxu0 0.0
    %351 = vmatpush2.msra.mxu0 0.0
    %352 = vmatprep.subr.mxu0 0.0
    %353 = vmatpush2.msra.mxu0 0.0
    %354 = vmatprep.subr.mxu0 0.0
    %355 = vmatpush2.msra.mxu0 0.0
    %356 = vmatprep.subr.mxu0 0.0
    %357 = vmatpush2.msra.mxu0 0.0
    %358 = vmatprep.subr.mxu0 0.0
    %359 = vmatpush2.msra.mxu0 0.0
    %360 = vmatprep.subr.mxu0 0.0
    %361 = vmatpush2.msra.mxu0 0.0
    %362 = vmatprep.subr.mxu0 0.0
    %363 = vmatpush2.msra.mxu0 0.0
    %364 = vmatprep.subr.mxu0 0.0
    %365 = vmatpush2.msra.mxu0 0.0
    %366 = vmatprep.mubr.f32.mxu0 0.0
    %367 = vmatmul.mubr.f32.gmra.mxu0 %v277
    %v368 = vpop.f32.mrf.mxu0
    %v369 = vadd.f32 %v300, %v368
    %v370 = vpop.f32.mrf.mxu0
    %371 = vmatprep.mubr.f32.mxu0 0.0
    %372 = vmatmul.mubr.f32.gmra.mxu0 %v278
    %v373 = vpop.f32.mrf.mxu0
    %v374 = vadd.f32 %v300, %v373
    %v375 = vpop.f32.mrf.mxu0
    %376 = vdwg.mxu0
    %vm377 = vcmask 130048
    %378 = vst.msk [vmem:[#allocation5] sm:$0xff] %vm377, %v369
    %379 = vst.msk [vmem:[#allocation5 + $0x8] sm:$0xff] %vm377, %v374
    // Predicated region
    $region34: #{_fcout_call.1} parent=1 // pred_check
      _
    $region35: #{_fcout_call.1} parent=1 // pred_check_branch
      %381 = sbr.rel (0) target = $region37
    $region36: #{_fcout_call.1} parent=1 // pred_region
      %s383 = ssub.s32 256, 256
      %384 = vsyncadd [#allocation4], %s383
      %s385 = sshll.u32 [#allocation5], 4
      %s386 = int_to_ptr.vmem [resolvable:$true] %s385
      %391 = dma.vmem_to_hbm [thread:$0]  %s386, 256, %s7, [#allocation4], 128, 128, 8
    $region37: #{_fcout_call.1} parent=1 // pred_fallthru
      _
    // Predicated region
    $region38: #{_fcout_call.1} parent=1 // pred_check
      _
    $region39: #{_fcout_call.1} parent=1 // pred_check_branch
      %393 = sbr.rel (0) target = $region41
    $region40: #{_fcout_call.1} parent=1 // pred_region
      %394 = dma.done [#allocation4], 256
    $region41: #{_fcout_call.1} parent=1 // pred_fallthru
      _
    %395 = vsyncpa [#allocation3], 1
    %396 = vsyncpa [#allocation4], 1

// kernel: _fcout_call.1
$region0: #{_fcout_call.1}
  #allocation0 [shape = 'u32[]', space=smem, size = 0x4, offset = 0x4, fixed_abs, tag = 'smem constant byte address 0x4 - core index']
  #allocation1 [shape = 'u32[144,128]{1,0:T(1,128)}', space=vmem, size = 0x12000, scoped, tag = 'internal scratch']
  %s0 = inlined_call_operand.vmem [shape: f32[13,32], index: 0, kind: input, shape index: {}]
  %s1 = inlined_call_operand.vmem [shape: f32[32,256], index: 1, kind: input, shape index: {}]
  %s2 = inlined_call_operand.vmem [shape: f32[1,256], index: 2, kind: input, shape index: {}]
  %s3 = inlined_call_operand.hbm [shape: f32[256,128], index: 3, kind: input, shape index: {}]
  %s4 = inlined_call_operand.vmem [shape: f32[1,128], index: 4, kind: input, shape index: {}]
  %s5 = inlined_call_operand.vmem [shape: f32[128,16], index: 5, kind: input, shape index: {}]
  %s6 = inlined_call_operand.vmem [shape: f32[1,16], index: 6, kind: input, shape index: {}]
  %s7 = inlined_call_operand.hbm [shape: f32[13,16], index: 7, kind: output, shape index: {}]
  %s8 = sld [smem:[#allocation0]]
  $region42: #{_fcout_call.1} parent=0
    _
  %s10 = ssub.s32 1, %s8
  %s11 = scalar_select 0, %s10, %s8
  $region1: #{_fcout_call.1} parent=0
    #allocation2 [shape = 'u8[131072]{0}', space=vmem, size = 0x20000, scoped, tag = 'input window, operand 3, single buffered']
    #allocation3 [shape = 's32[1]{0}', space=sflag, size = 0x4, scoped, tag = 'scoped memory for _fcout_call.1']
    #allocation4 [shape = 's32[1]{0}', space=sflag, size = 0x4, scoped, tag = 'scoped memory for _fcout_call.1']
    #allocation5 [shape = 'u8[8192]{0}', space=vmem, size = 0x2000, scoped, tag = 'output window, operand 0, single buffered']
    %12 = vsyncpa [#allocation3], 0
    %13 = vsyncpa [#allocation4], 0
    // Predicated region
    $region2: #{_fcout_call.1} parent=1 // pred_check
      _
    $region3: #{_fcout_call.1} parent=1 // pred_check_branch
      %15 = sbr.rel (0) target = $region5
    $region4: #{_fcout_call.1} parent=1 // pred_region
      _
    $region5: #{_fcout_call.1} parent=1 // pred_fallthru
      _
    // Predicated region
    $region6: #{_fcout_call.1} parent=1 // pred_check
      _
    $region7: #{_fcout_call.1} parent=1 // pred_check_branch
      %17 = sbr.rel (0) target = $region9
    $region8: #{_fcout_call.1} parent=1 // pred_region
      _
    $region9: #{_fcout_call.1} parent=1 // pred_fallthru
      _
    // Predicated region
    $region10: #{_fcout_call.1} parent=1 // pred_check
      _
    $region11: #{_fcout_call.1} parent=1 // pred_check_branch
      %19 = sbr.rel (0) target = $region13
    $region12: #{_fcout_call.1} parent=1 // pred_region
      _
    $region13: #{_fcout_call.1} parent=1 // pred_fallthru
      _
    // Predicated region
    $region14: #{_fcout_call.1} parent=1 // pred_check
      _
    $region15: #{_fcout_call.1} parent=1 // pred_check_branch
      %21 = sbr.rel (0) target = $region17
    $region16: #{_fcout_call.1} parent=1 // pred_region
      %s23 = ssub.s32 4096, 4096
      %24 = vsyncadd [#allocation3], %s23
      %s25 = sshll.u32 [#allocation2], 4
      %s26 = int_to_ptr.vmem [resolvable:$true] %s25
      %31 = dma.hbm_to_vmem [thread:$0]  %s3, 4096, %s26, [#allocation3], 128, 128, 8
    $region17: #{_fcout_call.1} parent=1 // pred_fallthru
      _
    // Predicated region
    $region18: #{_fcout_call.1} parent=1 // pred_check
      _
    $region19: #{_fcout_call.1} parent=1 // pred_check_branch
      %33 = sbr.rel (0) target = $region21
    $region20: #{_fcout_call.1} parent=1 // pred_region
      _
    $region21: #{_fcout_call.1} parent=1 // pred_fallthru
      _
    // Predicated region
    $region22: #{_fcout_call.1} parent=1 // pred_check
      _
    $region23: #{_fcout_call.1} parent=1 // pred_check_branch
      %35 = sbr.rel (0) target = $region25
    $region24: #{_fcout_call.1} parent=1 // pred_region
      _
    $region25: #{_fcout_call.1} parent=1 // pred_fallthru
      _
    // Predicated region
    $region26: #{_fcout_call.1} parent=1 // pred_check
      _
    $region27: #{_fcout_call.1} parent=1 // pred_check_branch
      %37 = sbr.rel (0) target = $region29
    $region28: #{_fcout_call.1} parent=1 // pred_region
      _
    $region29: #{_fcout_call.1} parent=1 // pred_fallthru
      _
    // Predicated region
    $region30: #{_fcout_call.1} parent=1 // pred_check
      _
    $region31: #{_fcout_call.1} parent=1 // pred_check_branch
      %39 = sbr.rel (0) target = $region33
    $region32: #{_fcout_call.1} parent=1 // pred_region
      %40 = dma.done [#allocation3], 4096
    $region33: #{_fcout_call.1} parent=1 // pred_fallthru
      _
    %v41 = vld [vmem:[%s0] sm:$0xff]
    %v42 = vld [vmem:[%s0 + $0x8] sm:$0xff]
    %v43 = vld [vmem:[%s1] sm:$0xff]
    %v44 = vld [vmem:[%s1 + $0x8] sm:$0xff]
    %v45 = vld [vmem:[%s1 + $0x10] sm:$0xff]
    %v46 = vld [vmem:[%s1 + $0x18] sm:$0xff]
    %v47 = vld [vmem:[%s1 + $0x20] sm:$0xff]
    %v48 = vld [vmem:[%s1 + $0x28] sm:$0xff]
    %v49 = vld [vmem:[%s1 + $0x30] sm:$0xff]
    %v50 = vld [vmem:[%s1 + $0x38] sm:$0xff]
    %v51 = vld [vmem:[%s2] sm:$0x3]
    %v53 = vlaneseq
    %v54 = vshrl.u32 %v53, 7
    %v55 = vsub.s32 0, %v54
    %v56 = vrot.slane %v51, %v55
    %v57 = vlaneseq
    %v58 = vshrl.u32 %v57, 7
    %v59 = vsub.s32 1, %v58
    %v60 = vrot.slane %v51, %v59
    %vm63 = vcmask 261120
    %v65 = vsel %vm63, %v41, 0
    %v68 = vsel %vm63, %v42, 0
    %70 = vmatprep.subr.mxu0 0.0
    %71 = vmatpush1.msra.mxu0 0.0
    %72 = vmatprep.subr.mxu0 0.0
    %73 = vmatpush1.msra.mxu0 0.0
    %74 = vmatprep.subr.mxu0 0.0
    %75 = vmatpush1.msra.mxu0 0.0
    %76 = vmatprep.subr.mxu0 0.0
    %77 = vmatpush1.msra.mxu0 0.0
    %78 = vmatprep.subr.mxu0 0.0
    %79 = vmatpush1.msra.mxu0 0.0
    %80 = vmatprep.subr.mxu0 0.0
    %81 = vmatpush1.msra.mxu0 0.0
    %82 = vmatprep.subr.mxu0 0.0
    %83 = vmatpush1.msra.mxu0 0.0
    %84 = vmatprep.subr.mxu0 0.0
    %85 = vmatpush1.msra.mxu0 0.0
    %86 = vmatprep.subr.mxu0 0.0
    %87 = vmatpush1.msra.mxu0 0.0
    %88 = vmatprep.subr.mxu0 0.0
    %89 = vmatpush1.msra.mxu0 0.0
    %90 = vmatprep.subr.mxu0 0.0
    %91 = vmatpush1.msra.mxu0 0.0
    %92 = vmatprep.subr.mxu0 0.0
    %93 = vmatpush1.msra.mxu0 0.0
    %94 = vmatprep.subr.mxu0 %v50
    %95 = vmatpush1.msra.mxu0 %v49
    %96 = vmatprep.subr.mxu0 %v48
    %97 = vmatpush1.msra.mxu0 %v47
    %98 = vmatprep.subr.mxu0 %v46
    %99 = vmatpush1.msra.mxu0 %v45
    %100 = vmatprep.subr.mxu0 %v44
    %101 = vmatpush1.msra.mxu0 %v43
    %102 = vmatprep.subr.mxu0 0.0
    %103 = vmatpush2.msra.mxu0 0.0
    %104 = vmatprep.subr.mxu0 0.0
    %105 = vmatpush2.msra.mxu0 0.0
    %106 = vmatprep.subr.mxu0 0.0
    %107 = vmatpush2.msra.mxu0 0.0
    %108 = vmatprep.subr.mxu0 0.0
    %109 = vmatpush2.msra.mxu0 0.0
    %110 = vmatprep.subr.mxu0 0.0
    %111 = vmatpush2.msra.mxu0 0.0
    %112 = vmatprep.subr.mxu0 0.0
    %113 = vmatpush2.msra.mxu0 0.0
    %114 = vmatprep.subr.mxu0 0.0
    %115 = vmatpush2.msra.mxu0 0.0
    %116 = vmatprep.subr.mxu0 0.0
    %117 = vmatpush2.msra.mxu0 0.0
    %118 = vmatprep.subr.mxu0 0.0
    %119 = vmatpush2.msra.mxu0 0.0
    %120 = vmatprep.subr.mxu0 0.0
    %121 = vmatpush2.msra.mxu0 0.0
    %122 = vmatprep.subr.mxu0 0.0
    %123 = vmatpush2.msra.mxu0 0.0
    %124 = vmatprep.subr.mxu0 0.0
    %125 = vmatpush2.msra.mxu0 0.0
    %126 = vmatprep.subr.mxu0 0.0
    %127 = vmatpush2.msra.mxu0 0.0
    %128 = vmatprep.subr.mxu0 0.0
    %129 = vmatpush2.msra.mxu0 0.0
    %130 = vmatprep.subr.mxu0 0.0
    %131 = vmatpush2.msra.mxu0 0.0
    %132 = vmatprep.subr.mxu0 0.0
    %133 = vmatpush2.msra.mxu0 0.0
    %134 = vmatprep.mubr.f32.mxu0 0.0
    %135 = vmatmul.mubr.f32.gmra.mxu0 %v65
    %v136 = vpop.f32.mrf.mxu0
    %v137 = vadd.f32 %v56, %v136
    %v138 = vpop.f32.mrf.mxu0
    %v139 = vadd.f32 %v60, %v138
    %140 = vmatprep.mubr.f32.mxu0 0.0
    %141 = vmatmul.mubr.f32.gmra.mxu0 %v68
    %v142 = vpop.f32.mrf.mxu0
    %v143 = vadd.f32 %v56, %v142
    %v144 = vpop.f32.mrf.mxu0
    %v145 = vadd.f32 %v60, %v144
    %146 = vdwg.mxu0
    %vm147 = vcmp.gt.f32.partialorder %v137, 0.0
    %vm148 = vcmp.gt.f32.partialorder %v139, 0.0
    %vm149 = vcmp.gt.f32.partialorder %v143, 0.0
    %vm150 = vcmp.gt.f32.partialorder %v145, 0.0
    %v151 = vmul.f32 %v137, 0.01
    %v152 = vmul.f32 %v139, 0.01
    %v153 = vmul.f32 %v143, 0.01
    %v154 = vmul.f32 %v145, 0.01
    %v155 = vsel %vm147, %v137, %v151
    %v156 = vsel %vm148, %v139, %v152
    %v157 = vsel %vm149, %v143, %v153
    %v158 = vsel %vm150, %v145, %v154
    %v159 = vld [vmem:[#allocation2] sm:$0xff]
    %v160 = vld [vmem:[#allocation2 + $0x8] sm:$0xff]
    %v161 = vld [vmem:[#allocation2 + $0x10] sm:$0xff]
    %v162 = vld [vmem:[#allocation2 + $0x18] sm:$0xff]
    %v163 = vld [vmem:[#allocation2 + $0x20] sm:$0xff]
    %v164 = vld [vmem:[#allocation2 + $0x28] sm:$0xff]
    %v165 = vld [vmem:[#allocation2 + $0x30] sm:$0xff]
    %v166 = vld [vmem:[#allocation2 + $0x38] sm:$0xff]
    %v167 = vld [vmem:[#allocation2 + $0x40] sm:$0xff]
    %v168 = vld [vmem:[#allocation2 + $0x48] sm:$0xff]
    %v169 = vld [vmem:[#allocation2 + $0x50] sm:$0xff]
    %v170 = vld [vmem:[#allocation2 + $0x58] sm:$0xff]
    %v171 = vld [vmem:[#allocation2 + $0x60] sm:$0xff]
    %v172 = vld [vmem:[#allocation2 + $0x68] sm:$0xff]
    %v173 = vld [vmem:[#allocation2 + $0x70] sm:$0xff]
    %v174 = vld [vmem:[#allocation2 + $0x78] sm:$0xff]
    %v175 = vld [vmem:[#allocation2 + $0x80] sm:$0xff]
    %v176 = vld [vmem:[#allocation2 + $0x88] sm:$0xff]
    %v177 = vld [vmem:[#allocation2 + $0x90] sm:$0xff]
    %v178 = vld [vmem:[#allocation2 + $0x98] sm:$0xff]
    %v179 = vld [vmem:[#allocation2 + $0xa0] sm:$0xff]
    %v180 = vld [vmem:[#allocation2 + $0xa8] sm:$0xff]
    %v181 = vld [vmem:[#allocation2 + $0xb0] sm:$0xff]
    %v182 = vld [vmem:[#allocation2 + $0xb8] sm:$0xff]
    %v183 = vld [vmem:[#allocation2 + $0xc0] sm:$0xff]
    %v184 = vld [vmem:[#allocation2 + $0xc8] sm:$0xff]
    %v185 = vld [vmem:[#allocation2 + $0xd0] sm:$0xff]
    %v186 = vld [vmem:[#allocation2 + $0xd8] sm:$0xff]
    %v187 = vld [vmem:[#allocation2 + $0xe0] sm:$0xff]
    %v188 = vld [vmem:[#allocation2 + $0xe8] sm:$0xff]
    %v189 = vld [vmem:[#allocation2 + $0xf0] sm:$0xff]
    %v190 = vld [vmem:[#allocation2 + $0xf8] sm:$0xff]
    %v191 = vld [vmem:[%s4] sm:$0x1]
    %v193 = vlaneseq
    %v194 = vshrl.u32 %v193, 7
    %v195 = vsub.s32 0, %v194
    %v196 = vrot.slane %v191, %v195
    %198 = vmatprep.subr.mxu0 0.0
    %199 = vmatpush1.msra.mxu0 %v174
    %200 = vmatprep.subr.mxu0 0.0
    %201 = vmatpush1.msra.mxu0 %v173
    %202 = vmatprep.subr.mxu0 0.0
    %203 = vmatpush1.msra.mxu0 %v172
    %204 = vmatprep.subr.mxu0 0.0
    %205 = vmatpush1.msra.mxu0 %v171
    %206 = vmatprep.subr.mxu0 0.0
    %207 = vmatpush1.msra.mxu0 %v170
    %208 = vmatprep.subr.mxu0 0.0
    %209 = vmatpush1.msra.mxu0 %v169
    %210 = vmatprep.subr.mxu0 0.0
    %211 = vmatpush1.msra.mxu0 %v168
    %212 = vmatprep.subr.mxu0 0.0
    %213 = vmatpush1.msra.mxu0 %v167
    %214 = vmatprep.subr.mxu0 0.0
    %215 = vmatpush1.msra.mxu0 %v166
    %216 = vmatprep.subr.mxu0 0.0
    %217 = vmatpush1.msra.mxu0 %v165
    %218 = vmatprep.subr.mxu0 0.0
    %219 = vmatpush1.msra.mxu0 %v164
    %220 = vmatprep.subr.mxu0 0.0
    %221 = vmatpush1.msra.mxu0 %v163
    %222 = vmatprep.subr.mxu0 0.0
    %223 = vmatpush1.msra.mxu0 %v162
    %224 = vmatprep.subr.mxu0 0.0
    %225 = vmatpush1.msra.mxu0 %v161
    %226 = vmatprep.subr.mxu0 0.0
    %227 = vmatpush1.msra.mxu0 %v160
    %228 = vmatprep.subr.mxu0 0.0
    %229 = vmatpush1.msra.mxu0 %v159
    %230 = vmatprep.subr.mxu0 0.0
    %231 = vmatpush2.msra.mxu0 %v190
    %232 = vmatprep.subr.mxu0 0.0
    %233 = vmatpush2.msra.mxu0 %v189
    %234 = vmatprep.subr.mxu0 0.0
    %235 = vmatpush2.msra.mxu0 %v188
    %236 = vmatprep.subr.mxu0 0.0
    %237 = vmatpush2.msra.mxu0 %v187
    %238 = vmatprep.subr.mxu0 0.0
    %239 = vmatpush2.msra.mxu0 %v186
    %240 = vmatprep.subr.mxu0 0.0
    %241 = vmatpush2.msra.mxu0 %v185
    %242 = vmatprep.subr.mxu0 0.0
    %243 = vmatpush2.msra.mxu0 %v184
    %244 = vmatprep.subr.mxu0 0.0
    %245 = vmatpush2.msra.mxu0 %v183
    %246 = vmatprep.subr.mxu0 0.0
    %247 = vmatpush2.msra.mxu0 %v182
    %248 = vmatprep.subr.mxu0 0.0
    %249 = vmatpush2.msra.mxu0 %v181
    %250 = vmatprep.subr.mxu0 0.0
    %251 = vmatpush2.msra.mxu0 %v180
    %252 = vmatprep.subr.mxu0 0.0
    %253 = vmatpush2.msra.mxu0 %v179
    %254 = vmatprep.subr.mxu0 0.0
    %255 = vmatpush2.msra.mxu0 %v178
    %256 = vmatprep.subr.mxu0 0.0
    %257 = vmatpush2.msra.mxu0 %v177
    %258 = vmatprep.subr.mxu0 0.0
    %259 = vmatpush2.msra.mxu0 %v176
    %260 = vmatprep.subr.mxu0 0.0
    %261 = vmatpush2.msra.mxu0 %v175
    %262 = vmatprep.mubr.f32.mxu0 %v156
    %263 = vmatmul.mubr.f32.gmra.mxu0 %v155
    %v264 = vpop.f32.mrf.mxu0
    %v265 = vadd.f32 %v196, %v264
    %v266 = vpop.f32.mrf.mxu0
    %267 = vmatprep.mubr.f32.mxu0 %v158
    %268 = vmatmul.mubr.f32.gmra.mxu0 %v157
    %v269 = vpop.f32.mrf.mxu0
    %v270 = vadd.f32 %v196, %v269
    %v271 = vpop.f32.mrf.mxu0
    %272 = vdwg.mxu0
    %vm273 = vcmp.gt.f32.partialorder %v265, 0.0
    %vm274 = vcmp.gt.f32.partialorder %v270, 0.0
    %v275 = vmul.f32 %v265, 0.01
    %v276 = vmul.f32 %v270, 0.01
    %v277 = vsel %vm273, %v265, %v275
    %v278 = vsel %vm274, %v270, %v276
    %v279 = vld [vmem:[%s5] sm:$0xff]
    %v280 = vld [vmem:[%s5 + $0x8] sm:$0xff]
    %v281 = vld [vmem:[%s5 + $0x10] sm:$0xff]
    %v282 = vld [vmem:[%s5 + $0x18] sm:$0xff]
    %v283 = vld [vmem:[%s5 + $0x20] sm:$0xff]
    %v284 = vld [vmem:[%s5 + $0x28] sm:$0xff]
    %v285 = vld [vmem:[%s5 + $0x30] sm:$0xff]
    %v286 = vld [vmem:[%s5 + $0x38] sm:$0xff]
    %v287 = vld [vmem:[%s5 + $0x40] sm:$0xff]
    %v288 = vld [vmem:[%s5 + $0x48] sm:$0xff]
    %v289 = vld [vmem:[%s5 + $0x50] sm:$0xff]
    %v290 = vld [vmem:[%s5 + $0x58] sm:$0xff]
    %v291 = vld [vmem:[%s5 + $0x60] sm:$0xff]
    %v292 = vld [vmem:[%s5 + $0x68] sm:$0xff]
    %v293 = vld [vmem:[%s5 + $0x70] sm:$0xff]
    %v294 = vld [vmem:[%s5 + $0x78] sm:$0xff]
    %v295 = vld [vmem:[%s6] sm:$0x1]
    %v297 = vlaneseq
    %v298 = vshrl.u32 %v297, 7
    %v299 = vsub.s32 0, %v298
    %v300 = vrot.slane %v295, %v299
    %302 = vmatprep.subr.mxu0 0.0
    %303 = vmatpush1.msra.mxu0 %v294
    %304 = vmatprep.subr.mxu0 0.0
    %305 = vmatpush1.msra.mxu0 %v293
    %306 = vmatprep.subr.mxu0 0.0
    %307 = vmatpush1.msra.mxu0 %v292
    %308 = vmatprep.subr.mxu0 0.0
    %309 = vmatpush1.msra.mxu0 %v291
    %310 = vmatprep.subr.mxu0 0.0
    %311 = vmatpush1.msra.mxu0 %v290
    %312 = vmatprep.subr.mxu0 0.0
    %313 = vmatpush1.msra.mxu0 %v289
    %314 = vmatprep.subr.mxu0 0.0
    %315 = vmatpush1.msra.mxu0 %v288
    %316 = vmatprep.subr.mxu0 0.0
    %317 = vmatpush1.msra.mxu0 %v287
    %318 = vmatprep.subr.mxu0 0.0
    %319 = vmatpush1.msra.mxu0 %v286
    %320 = vmatprep.subr.mxu0 0.0
    %321 = vmatpush1.msra.mxu0 %v285
    %322 = vmatprep.subr.mxu0 0.0
    %323 = vmatpush1.msra.mxu0 %v284
    %324 = vmatprep.subr.mxu0 0.0
    %325 = vmatpush1.msra.mxu0 %v283
    %326 = vmatprep.subr.mxu0 0.0
    %327 = vmatpush1.msra.mxu0 %v282
    %328 = vmatprep.subr.mxu0 0.0
    %329 = vmatpush1.msra.mxu0 %v281
    %330 = vmatprep.subr.mxu0 0.0
    %331 = vmatpush1.msra.mxu0 %v280
    %332 = vmatprep.subr.mxu0 0.0
    %333 = vmatpush1.msra.mxu0 %v279
    %334 = vmatprep.subr.mxu0 0.0
    %335 = vmatpush2.msra.mxu0 0.0
    %336 = vmatprep.subr.mxu0 0.0
    %337 = vmatpush2.msra.mxu0 0.0
    %338 = vmatprep.subr.mxu0 0.0
    %339 = vmatpush2.msra.mxu0 0.0
    %340 = vmatprep.subr.mxu0 0.0
    %341 = vmatpush2.msra.mxu0 0.0
    %342 = vmatprep.subr.mxu0 0.0
    %343 = vmatpush2.msra.mxu0 0.0
    %344 = vmatprep.subr.mxu0 0.0
    %345 = vmatpush2.msra.mxu0 0.0
    %346 = vmatprep.subr.mxu0 0.0
    %347 = vmatpush2.msra.mxu0 0.0
    %348 = vmatprep.subr.mxu0 0.0
    %349 = vmatpush2.msra.mxu0 0.0
    %350 = vmatprep.subr.mxu0 0.0
    %351 = vmatpush2.msra.mxu0 0.0
    %352 = vmatprep.subr.mxu0 0.0
    %353 = vmatpush2.msra.mxu0 0.0
    %354 = vmatprep.subr.mxu0 0.0
    %355 = vmatpush2.msra.mxu0 0.0
    %356 = vmatprep.subr.mxu0 0.0
    %357 = vmatpush2.msra.mxu0 0.0
    %358 = vmatprep.subr.mxu0 0.0
    %359 = vmatpush2.msra.mxu0 0.0
    %360 = vmatprep.subr.mxu0 0.0
    %361 = vmatpush2.msra.mxu0 0.0
    %362 = vmatprep.subr.mxu0 0.0
    %363 = vmatpush2.msra.mxu0 0.0
    %364 = vmatprep.subr.mxu0 0.0
    %365 = vmatpush2.msra.mxu0 0.0
    %366 = vmatprep.mubr.f32.mxu0 0.0
    %367 = vmatmul.mubr.f32.gmra.mxu0 %v277
    %v368 = vpop.f32.mrf.mxu0
    %v369 = vadd.f32 %v300, %v368
    %v370 = vpop.f32.mrf.mxu0
    %371 = vmatprep.mubr.f32.mxu0 0.0
    %372 = vmatmul.mubr.f32.gmra.mxu0 %v278
    %v373 = vpop.f32.mrf.mxu0
    %v374 = vadd.f32 %v300, %v373
    %v375 = vpop.f32.mrf.mxu0
    %376 = vdwg.mxu0
    %vm377 = vcmask 130048
    %378 = vst.msk [vmem:[#allocation5] sm:$0xff] %vm377, %v369
    %379 = vst.msk [vmem:[#allocation5 + $0x8] sm:$0xff] %vm377, %v374
    // Predicated region
    $region34: #{_fcout_call.1} parent=1 // pred_check
      _
    $region35: #{_fcout_call.1} parent=1 // pred_check_branch
      %381 = sbr.rel (0) target = $region37
    $region36: #{_fcout_call.1} parent=1 // pred_region
      %s383 = ssub.s32 256, 256
      %384 = vsyncadd [#allocation4], %s383
      %s385 = sshll.u32 [#allocation5], 4
      %s386 = int_to_ptr.vmem [resolvable:$true] %s385
      %391 = dma.vmem_to_hbm [thread:$0]  %s386, 256, %s7, [#allocation4], 128, 128, 8
    $region37: #{_fcout_call.1} parent=1 // pred_fallthru
      _
    // Predicated region
    $region38: #{_fcout_call.1} parent=1 // pred_check
      _
    $region39: #{_fcout_call.1} parent=1 // pred_check_branch
      %393 = sbr.rel (0) target = $region41
    $region40: #{_fcout_call.1} parent=1 // pred_region
      %394 = dma.done [#allocation4], 256
    $region41: #{_fcout_call.1} parent=1 // pred_fallthru
      _
    %395 = vsyncpa [#allocation3], 1
    %396 = vsyncpa [#allocation4], 1

</llo_original>
